<compile_context>
chip_gen: v5e
topology: v5e:2x2
jax: 0.10.0
libtpu: 0.0.40
codegen_flags: <defaults>
</compile_context>

<pallas_src>
import functools
import math

import jax
import jax.numpy as jnp
import numpy as np
from jax.experimental import pallas as pl
from jax.experimental.pallas import tpu as pltpu

_LANES = 128
_TARGET_TILE_BYTES = 2 << 20   # ~2 MiB output tiles (safe for v5e/v6e/v7x scoped VMEM)


def _round_up(n: int, m: int) -> int:
    return ((n + m - 1) // m) * m


@functools.lru_cache(maxsize=None)
def _tables(embedding_size: int, pack: int):
    """Per-(E, pack) constant tables, built once (hoisted out of the per-call path).

    onehot: (K, W) f32 with K = max(pack, 8); row i (< pack) is 1.0 on lane-group i and
            0.0 elsewhere, so  x_bcast = x_packed^T @ onehot  is an exact lane broadcast
            of the packed timesteps (MXU, precision=HIGHEST; zero rows pad K to 8).
    wk_row: (1, W) f32 — pair-repeated frequencies [w0,w0,w1,w1,...] tiled pack times.
    phase:  (1, W) f32 — [0, pi/2, 0, pi/2, ...] tiled; cos(t) == sin(t + pi/2), so a
            single transcendental per output element.
    """
    E = embedding_size
    W = E * pack
    wk = (1.0 / (10000.0 ** (np.arange(0, E, 2, dtype=np.float32) / np.float32(E)))
          ).astype(np.float32)
    wk_row = np.tile(np.repeat(wk, 2), pack).reshape(1, W)
    phase_row = np.tile(np.tile(np.array([0.0, np.pi / 2.0], np.float32), E // 2),
                        pack).reshape(1, W)
    if pack > 1:
        kdim = max(pack, 8)
        onehot = np.zeros((kdim, W), np.float32)
        for i in range(pack):
            onehot[i, i * E:(i + 1) * E] = 1.0
        onehot_j = jnp.asarray(onehot)
    else:
        onehot_j = None
    return onehot_j, jnp.asarray(wk_row), jnp.asarray(phase_row)


def _kernel_packed(x_ref, onehot_ref, wk_ref, phase_ref, out_ref):
    # x_ref:      (K, TILE_R) f32 — pack timesteps per output row, lane-dense block
    # onehot_ref: (K, W)      f32 — 0/1 selector (resident across the grid)
    # wk_ref:     (1, W) f32, phase_ref: (1, W) f32 (resident)
    # out_ref:    (TILE_R, W)
    #
    # MXU lane-broadcast: x_bcast[r, j] = packed timestep owning lane j of row r.
    # With 0/1 weights and HIGHEST precision this is an exact f32 copy, so everything
    # feeding sin() stays exact on the VPU, and the formerly VALU-bound O(pack)
    # broadcast-accumulate loop moves onto the otherwise idle MXU slot.
    x_bcast = jax.lax.dot_general(
        x_ref[...], onehot_ref[...],
        dimension_numbers=(((0,), (0,)), ((), ())),   # contract the (padded) pack axis
        preferred_element_type=jnp.float32,
        precision=jax.lax.Precision.HIGHEST)
    out_ref[...] = jnp.sin(x_bcast * wk_ref[...] + phase_ref[...]).astype(out_ref.dtype)


def _kernel_unpacked(x_ref, wk_ref, phase_ref, out_ref):
    # pack == 1 (E already a multiple of 128 lanes): exact VPU outer product.
    # x_ref: (TILE_R, 1); wk_ref / phase_ref: (1, W); out_ref: (TILE_R, W)
    out_ref[...] = jnp.sin(x_ref[...] * wk_ref[...] + phase_ref[...]).astype(out_ref.dtype)


def sinusoidal_position_embeddings(x, embedding_size, *, out_dtype=jnp.float32):
    """x: (batch,) timesteps -> (batch, embedding_size); matches the PyTorch module."""
    if embedding_size % 2 != 0:
        raise ValueError("embedding_size must be even (module interleaves sin/cos pairs)")
    assert x.ndim == 1, "x must have shape (batch,)"
    batch = int(x.shape[0])
    E = embedding_size

    # Lane-dense packing: W = lcm(E, 128) lanes per output row -> unmasked 128-lane stores.
    pack = _LANES // math.gcd(E, _LANES)          # power of two in [1, 64]
    W = E * pack

    onehot, wk_row, phase_row = _tables(E, pack)

    rows = -(-batch // pack)                      # ceil(batch / pack)
    padded_batch = rows * pack                    # pad batch only to a multiple of pack
    x32 = x.astype(jnp.float32)
    if padded_batch != batch:
        x32 = jnp.pad(x32, (0, padded_batch - batch))

    # Tile the row axis.  tile_rows is either the whole axis (small case: block == full
    # dims, so no (8,128) constraints) or a multiple of 128 so the transposed x block
    # (K, tile_rows) stays lane-aligned.  rows itself is NOT padded — Pallas masks the
    # ragged last block, so no wrapper-side de-pad copy is needed.
    if rows <= _LANES:
        tile_rows, grid_r = rows, 1
    else:
        target_rows = max(_LANES, (_TARGET_TILE_BYTES // (W * 4)) // _LANES * _LANES)
        half_rows = _round_up(-(-rows // 2), _LANES)   # guarantee >= 2 tiles (v7x, 2 TCs)
        tile_rows = min(target_rows, half_rows)
        grid_r = -(-rows // tile_rows)

    if pack > 1:
        kdim = max(pack, 8)
        # Transposed, lane-dense x layout: (K, rows); block (K, tile_rows) costs
        # ~K x tile_rows words in VMEM instead of a 128-lane-padded (tile_rows, pack) block.
        x_in = x32.reshape(rows, pack).T
        if kdim != pack:
            x_in = jnp.pad(x_in, ((0, kdim - pack), (0, 0)))
        kernel = _kernel_packed
        in_specs = [
            pl.BlockSpec((kdim, tile_rows), lambda r: (0, r)),
            pl.BlockSpec((kdim, W), lambda r: (0, 0)),   # resident across the grid
            pl.BlockSpec((1, W), lambda r: (0, 0)),      # resident
            pl.BlockSpec((1, W), lambda r: (0, 0)),      # resident
        ]
        args = (x_in, onehot, wk_row, phase_row)
    else:
        x_in = x32.reshape(rows, 1)
        kernel = _kernel_unpacked
        in_specs = [
            pl.BlockSpec((tile_rows, 1), lambda r: (r, 0)),
            pl.BlockSpec((1, W), lambda r: (0, 0)),      # resident
            pl.BlockSpec((1, W), lambda r: (0, 0)),      # resident
        ]
        args = (x_in, wk_row, phase_row)

    out = pl.pallas_call(
        kernel,
        out_shape=jax.ShapeDtypeStruct((rows, W), out_dtype),
        grid=(grid_r,),
        in_specs=in_specs,
        out_specs=pl.BlockSpec((tile_rows, W), lambda r: (r, 0)),
        compiler_params=pltpu.CompilerParams(
            dimension_semantics=("parallel",),   # v7x: shard row tiles across both TCs
        ),
    )(*args)

    # (rows, W) -> (rows*pack, E) is a contiguous row-major reshape (no data movement);
    # slice only when the batch had to be padded up to a multiple of pack.
    flat = out.reshape(rows * pack, E)
    return flat if padded_batch == batch else flat[:batch]


def _reference(x, embedding_size):
    wk = 1.0 / (10000.0 ** (jnp.arange(0, embedding_size, 2, dtype=jnp.float32)
                            / float(embedding_size)))
    wkx = x.astype(jnp.float32)[:, None] * wk[None, :]
    stacked = jnp.stack([jnp.sin(wkx), jnp.cos(wkx)], axis=-1)
    return stacked.reshape(x.shape[0], embedding_size)


if __name__ == "__main__":
    key = jax.random.PRNGKey(0)
    k1, k2, k3 = jax.random.split(key, 3)

    # Config 1: small batch, E < 128 -> packed MXU path (pack=4, W=128), single tile.
    batch, embedding_size = 8, 32
    x = jax.random.uniform(k1, (batch,), minval=0.0, maxval=1000.0, dtype=jnp.float32)
    out = jax.block_until_ready(sinusoidal_position_embeddings(x, embedding_size))
    ref = _reference(x, embedding_size)
    assert out.shape == (batch, embedding_size) and out.dtype == jnp.float32
    # cos(t) is computed as sin(t + pi/2); at t ~ 1e3 the f32 rounding of (t + pi/2)
    # shifts the argument by up to ~3e-5, hence the slightly relaxed tolerance.
    assert jnp.allclose(out, ref, atol=5e-4, rtol=1e-4), "mismatch vs reference (E=32)"

    # Config 2: E >= 128 -> unpacked VPU path (pack=1), batch not a multiple of 8.
    batch2, embedding_size2 = 10, 256
    x_b = jax.random.uniform(k2, (batch2,), minval=0.0, maxval=1000.0, dtype=jnp.float32)
    out2 = jax.block_until_ready(sinusoidal_position_embeddings(x_b, embedding_size2))
    ref2 = _reference(x_b, embedding_size2)
    assert out2.shape == (batch2, embedding_size2)
    assert jnp.allclose(out2, ref2, atol=5e-4, rtol=1e-4), "mismatch vs reference (E=256)"

    # Config 3: larger batch -> multi-tile grid (2 x 256-row tiles), packed MXU path.
    batch3, embedding_size3 = 1024, 64
    x_c = jax.random.uniform(k3, (batch3,), minval=0.0, maxval=1000.0, dtype=jnp.float32)
    out3 = jax.block_until_ready(sinusoidal_position_embeddings(x_c, embedding_size3))
    ref3 = _reference(x_c, embedding_size3)
    assert out3.shape == (batch3, embedding_size3)
    assert jnp.allclose(out3, ref3, atol=5e-4, rtol=1e-4), "mismatch vs reference (E=64)"

    print("KERNEL_OK")
</pallas_src>

<mosaic_0001>
module attributes {stable_mosaic.version = 11 : i64} {
  func.func @_kernel_packed(%arg0: i32, %arg1: memref<8x2xf32, #tpu.memory_space<vmem>>, %arg2: memref<8x128xf32, #tpu.memory_space<vmem>>, %arg3: memref<1x128xf32, #tpu.memory_space<vmem>>, %arg4: memref<1x128xf32, #tpu.memory_space<vmem>>, %arg5: memref<2x128xf32, #tpu.memory_space<vmem>>) attributes {dimension_semantics = [#tpu.dimension_semantics<parallel>], iteration_bounds = array<i64: 1>, scalar_prefetch = 0 : i64, scratch_operands = 0 : i64, tpu.core_type = #tpu.core_type<tc>, window_params = [{transform_indices = @transform_0, window_bounds = array<i64: 8, 2>}, {pipeline_mode = #tpu.pipeline_mode<synchronous>, transform_indices = @transform_1, window_bounds = array<i64: 8, 128>}, {pipeline_mode = #tpu.pipeline_mode<synchronous>, transform_indices = @transform_2, window_bounds = array<i64: 1, 128>}, {pipeline_mode = #tpu.pipeline_mode<synchronous>, transform_indices = @transform_3, window_bounds = array<i64: 1, 128>}, {transform_indices = @transform_4, window_bounds = array<i64: 2, 128>}]} {
    %c0 = arith.constant 0 : index
    %c0_0 = arith.constant 0 : index
    %0 = vector.load %arg1[%c0, %c0_0] : memref<8x2xf32, #tpu.memory_space<vmem>>, vector<8x2xf32>
    %c0_1 = arith.constant 0 : index
    %c0_2 = arith.constant 0 : index
    %1 = vector.load %arg2[%c0_1, %c0_2] : memref<8x128xf32, #tpu.memory_space<vmem>>, vector<8x128xf32>
    %cst = arith.constant dense<0.000000e+00> : vector<2x128xf32>
    %2 = tpu.matmul %0, %1, %cst {dimension_numbers = #tpu.dot_dimension_numbers<[0], [0], [1], [1], [0, 1, 1, 1], [], []>, precision = #tpu.contract_precision<fp32>} : vector<8x2xf32>, vector<8x128xf32>, vector<2x128xf32> -> vector<2x128xf32>
    %c0_3 = arith.constant 0 : index
    %c0_4 = arith.constant 0 : index
    %3 = vector.load %arg3[%c0_3, %c0_4] : memref<1x128xf32, #tpu.memory_space<vmem>>, vector<1x128xf32>
    %4 = vector.broadcast %3 : vector<1x128xf32> to vector<2x128xf32>
    %5 = arith.mulf %2, %4 : vector<2x128xf32>
    %c0_5 = arith.constant 0 : index
    %c0_6 = arith.constant 0 : index
    %6 = vector.load %arg4[%c0_5, %c0_6] : memref<1x128xf32, #tpu.memory_space<vmem>>, vector<1x128xf32>
    %7 = vector.broadcast %6 : vector<1x128xf32> to vector<2x128xf32>
    %8 = arith.addf %5, %7 : vector<2x128xf32>
    %9 = math.sin %8 : vector<2x128xf32>
    %c0_7 = arith.constant 0 : index
    %c0_8 = arith.constant 0 : index
    %10 = vector.load %arg5[%c0_7, %c0_8] : memref<2x128xf32, #tpu.memory_space<vmem>>, vector<2x128xf32>
    tpu.vector_store %arg5[%c0_7, %c0_8], %9 {strides = array<i32>} : memref<2x128xf32, #tpu.memory_space<vmem>>, vector<2x128xf32>,
    return
  }
  func.func @transform_0(%arg0: i32) -> (i32, i32) {
    %c0_i32 = arith.constant 0 : i32
    %c0_i32_0 = arith.constant 0 : i32
    return %c0_i32, %arg0 : i32, i32
  }
  func.func @transform_1(%arg0: i32) -> (i32, i32) {
    %c0_i32 = arith.constant 0 : i32
    %c0_i32_0 = arith.constant 0 : i32
    %c0_i32_1 = arith.constant 0 : i32
    return %c0_i32, %c0_i32_0 : i32, i32
  }
  func.func @transform_2(%arg0: i32) -> (i32, i32) {
    %c0_i32 = arith.constant 0 : i32
    %c0_i32_0 = arith.constant 0 : i32
    %c0_i32_1 = arith.constant 0 : i32
    return %c0_i32, %c0_i32_0 : i32, i32
  }
  func.func @transform_3(%arg0: i32) -> (i32, i32) {
    %c0_i32 = arith.constant 0 : i32
    %c0_i32_0 = arith.constant 0 : i32
    %c0_i32_1 = arith.constant 0 : i32
    return %c0_i32, %c0_i32_0 : i32, i32
  }
  func.func @transform_4(%arg0: i32) -> (i32, i32) {
    %c0_i32 = arith.constant 0 : i32
    %c0_i32_0 = arith.constant 0 : i32
    return %arg0, %c0_i32 : i32, i32
  }
}

</mosaic_0001>

<llo_original>
// kernel: tpu_custom_call.1
$region0: #{tpu_custom_call.1}
  #allocation0 [shape = 'u32[]', space=smem, size = 0x4, offset = 0x4, fixed_abs, tag = 'smem constant byte address 0x4 - core index']
  #allocation1 [shape = 'u32[72,128]{1,0:T(1,128)}', space=vmem, size = 0x9000, scoped, tag = 'internal scratch']
  %s0 = inlined_call_operand.vmem [shape: f32[8,2], index: 0, kind: input, shape index: {}]
  %s1 = inlined_call_operand.vmem [shape: f32[8,128], index: 1, kind: input, shape index: {}]
  %s2 = inlined_call_operand.vmem [shape: f32[1,128], index: 2, kind: input, shape index: {}]
  %s3 = inlined_call_operand.vmem [shape: f32[1,128], index: 3, kind: input, shape index: {}]
  %s4 = inlined_call_operand.hbm [shape: f32[2,128], index: 4, kind: output, shape index: {}]
  %s5 = sld [smem:[#allocation0]]
  $region26: #{tpu_custom_call.1} parent=0
    _
  %s7 = ssub.s32 1, %s5
  %s8 = scalar_select 0, %s7, %s5
  $region1: #{tpu_custom_call.1} parent=0
    #allocation2 [shape = 'u8[1024]{0}', space=vmem, size = 0x400, scoped, tag = 'output window, operand 0, single buffered']
    #allocation3 [shape = 's32[1]{0}', space=sflag, size = 0x4, scoped, tag = 'scoped memory for tpu_custom_call.1']
    %9 = vsyncpa [#allocation3], 0
    // Predicated region
    $region2: #{tpu_custom_call.1} parent=1 // pred_check
      _
    $region3: #{tpu_custom_call.1} parent=1 // pred_check_branch
      %11 = sbr.rel (0) target = $region5
    $region4: #{tpu_custom_call.1} parent=1 // pred_region
      _
    $region5: #{tpu_custom_call.1} parent=1 // pred_fallthru
      _
    // Predicated region
    $region6: #{tpu_custom_call.1} parent=1 // pred_check
      _
    $region7: #{tpu_custom_call.1} parent=1 // pred_check_branch
      %13 = sbr.rel (0) target = $region9
    $region8: #{tpu_custom_call.1} parent=1 // pred_region
      _
    $region9: #{tpu_custom_call.1} parent=1 // pred_fallthru
      _
    // Predicated region
    $region10: #{tpu_custom_call.1} parent=1 // pred_check
      _
    $region11: #{tpu_custom_call.1} parent=1 // pred_check_branch
      %15 = sbr.rel (0) target = $region13
    $region12: #{tpu_custom_call.1} parent=1 // pred_region
      _
    $region13: #{tpu_custom_call.1} parent=1 // pred_fallthru
      _
    // Predicated region
    $region14: #{tpu_custom_call.1} parent=1 // pred_check
      _
    $region15: #{tpu_custom_call.1} parent=1 // pred_check_branch
      %17 = sbr.rel (0) target = $region17
    $region16: #{tpu_custom_call.1} parent=1 // pred_region
      _
    $region17: #{tpu_custom_call.1} parent=1 // pred_fallthru
      _
    %v18 = vld [vmem:[%s0] sm:$0xff]
    %v19 = vld [vmem:[%s1] sm:$0xff]
    %20 = vxpose.xlu0.b32.start [1/16] %v18, 128
    %21 = vxpose.xlu0.b32.cont [2/16] 0.0, 128
    %22 = vxpose.xlu0.b32.cont [3/16] 0.0, 128
    %23 = vxpose.xlu0.b32.cont [4/16] 0.0, 128
    %24 = vxpose.xlu0.b32.cont [5/16] 0.0, 128
    %25 = vxpose.xlu0.b32.cont [6/16] 0.0, 128
    %26 = vxpose.xlu0.b32.cont [7/16] 0.0, 128
    %27 = vxpose.xlu0.b32.cont [8/16] 0.0, 128
    %28 = vxpose.xlu0.b32.cont [9/16] 0.0, 128
    %29 = vxpose.xlu0.b32.cont [10/16] 0.0, 128
    %30 = vxpose.xlu0.b32.cont [11/16] 0.0, 128
    %31 = vxpose.xlu0.b32.cont [12/16] 0.0, 128
    %32 = vxpose.xlu0.b32.cont [13/16] 0.0, 128
    %33 = vxpose.xlu0.b32.cont [14/16] 0.0, 128
    %34 = vxpose.xlu0.b32.cont [15/16] 0.0, 128
    %35 = vxpose.xlu0.b32.end [16/16] 0.0, 128
    %v36 = vpop.trf.xlu0
    %v37 = vpop.trf.xlu0
    %v38 = vpop.trf.xlu0
    %v39 = vpop.trf.xlu0
    %v40 = vpop.trf.xlu0
    %v41 = vpop.trf.xlu0
    %v42 = vpop.trf.xlu0
    %v43 = vpop.trf.xlu0
    %v44 = vpop.trf.xlu0
    %v45 = vpop.trf.xlu0
    %v46 = vpop.trf.xlu0
    %v47 = vpop.trf.xlu0
    %v48 = vpop.trf.xlu0
    %v49 = vpop.trf.xlu0
    %v50 = vpop.trf.xlu0
    %v51 = vpop.trf.xlu0
    %vm52 = vcmask 64512
    %v54 = vsel %vm52, %v36, 0
    %56 = vmatpush.msra.mxu0 0.0
    %57 = vmatpush.msra.mxu0 0.0
    %58 = vmatpush.msra.mxu0 0.0
    %59 = vmatpush.msra.mxu0 0.0
    %60 = vmatpush.msra.mxu0 0.0
    %61 = vmatpush.msra.mxu0 0.0
    %62 = vmatpush.msra.mxu0 0.0
    %63 = vmatpush.msra.mxu0 0.0
    %64 = vmatpush.msra.mxu0 0.0
    %65 = vmatpush.msra.mxu0 0.0
    %66 = vmatpush.msra.mxu0 0.0
    %67 = vmatpush.msra.mxu0 0.0
    %68 = vmatpush.msra.mxu0 0.0
    %69 = vmatpush.msra.mxu0 0.0
    %70 = vmatpush.msra.mxu0 0.0
    %v71 = vand.u32 %v19, 4294901760
    %72 = vmatpush.msra.mxu0 %v71
    %v73 = vand.u32 %v54, 4294901760
    %v74 = vsub.f32 %v54, %v73
    %v75 = vand.u32 %v74, 4294901760
    %v76 = vsub.f32 %v74, %v75
    %v77 = vand.u32 %v76, 4294901760
    %78 = vmatmul.f32.gmra.mxu0 %v77
    %v79 = vpop.f32.mrf.mxu0
    %v80 = vadd.f32 0.0, %v79
    %81 = vdwg.mxu0
    %82 = vmatpush.msra.mxu0 0.0
    %83 = vmatpush.msra.mxu0 0.0
    %84 = vmatpush.msra.mxu0 0.0
    %85 = vmatpush.msra.mxu0 0.0
    %86 = vmatpush.msra.mxu0 0.0
    %87 = vmatpush.msra.mxu0 0.0
    %88 = vmatpush.msra.mxu0 0.0
    %89 = vmatpush.msra.mxu0 0.0
    %90 = vmatpush.msra.mxu0 0.0
    %91 = vmatpush.msra.mxu0 0.0
    %92 = vmatpush.msra.mxu0 0.0
    %93 = vmatpush.msra.mxu0 0.0
    %94 = vmatpush.msra.mxu0 0.0
    %95 = vmatpush.msra.mxu0 0.0
    %96 = vmatpush.msra.mxu0 0.0
    %v97 = vand.u32 %v19, 4294901760
    %v98 = vsub.f32 %v19, %v97
    %v99 = vand.u32 %v98, 4294901760
    %v100 = vsub.f32 %v98, %v99
    %v101 = vand.u32 %v100, 4294901760
    %102 = vmatpush.msra.mxu0 %v101
    %v103 = vand.u32 %v54, 4294901760
    %104 = vmatmul.f32.gmra.mxu0 %v103
    %v105 = vpop.f32.mrf.mxu0
    %v106 = vadd.f32 %v80, %v105
    %107 = vdwg.mxu0
    %108 = vmatpush.msra.mxu0 0.0
    %109 = vmatpush.msra.mxu0 0.0
    %110 = vmatpush.msra.mxu0 0.0
    %111 = vmatpush.msra.mxu0 0.0
    %112 = vmatpush.msra.mxu0 0.0
    %113 = vmatpush.msra.mxu0 0.0
    %114 = vmatpush.msra.mxu0 0.0
    %115 = vmatpush.msra.mxu0 0.0
    %116 = vmatpush.msra.mxu0 0.0
    %117 = vmatpush.msra.mxu0 0.0
    %118 = vmatpush.msra.mxu0 0.0
    %119 = vmatpush.msra.mxu0 0.0
    %120 = vmatpush.msra.mxu0 0.0
    %121 = vmatpush.msra.mxu0 0.0
    %122 = vmatpush.msra.mxu0 0.0
    %v123 = vand.u32 %v19, 4294901760
    %v124 = vsub.f32 %v19, %v123
    %125 = vmatpush.msra.mxu0 %v124
    %v126 = vand.u32 %v54, 4294901760
    %v127 = vsub.f32 %v54, %v126
    %128 = vmatmul.f32.gmra.mxu0 %v127
    %v129 = vpop.f32.mrf.mxu0
    %v130 = vadd.f32 %v106, %v129
    %131 = vdwg.mxu0
    %132 = vmatpush.msra.mxu0 0.0
    %133 = vmatpush.msra.mxu0 0.0
    %134 = vmatpush.msra.mxu0 0.0
    %135 = vmatpush.msra.mxu0 0.0
    %136 = vmatpush.msra.mxu0 0.0
    %137 = vmatpush.msra.mxu0 0.0
    %138 = vmatpush.msra.mxu0 0.0
    %139 = vmatpush.msra.mxu0 0.0
    %140 = vmatpush.msra.mxu0 0.0
    %141 = vmatpush.msra.mxu0 0.0
    %142 = vmatpush.msra.mxu0 0.0
    %143 = vmatpush.msra.mxu0 0.0
    %144 = vmatpush.msra.mxu0 0.0
    %145 = vmatpush.msra.mxu0 0.0
    %146 = vmatpush.msra.mxu0 0.0
    %v147 = vand.u32 %v19, 4294901760
    %148 = vmatpush.msra.mxu0 %v147
    %v149 = vand.u32 %v54, 4294901760
    %v150 = vsub.f32 %v54, %v149
    %v151 = vand.u32 %v150, 4294901760
    %152 = vmatmul.f32.gmra.mxu0 %v151
    %v153 = vpop.f32.mrf.mxu0
    %v154 = vadd.f32 %v130, %v153
    %155 = vdwg.mxu0
    %156 = vmatpush.msra.mxu0 0.0
    %157 = vmatpush.msra.mxu0 0.0
    %158 = vmatpush.msra.mxu0 0.0
    %159 = vmatpush.msra.mxu0 0.0
    %160 = vmatpush.msra.mxu0 0.0
    %161 = vmatpush.msra.mxu0 0.0
    %162 = vmatpush.msra.mxu0 0.0
    %163 = vmatpush.msra.mxu0 0.0
    %164 = vmatpush.msra.mxu0 0.0
    %165 = vmatpush.msra.mxu0 0.0
    %166 = vmatpush.msra.mxu0 0.0
    %167 = vmatpush.msra.mxu0 0.0
    %168 = vmatpush.msra.mxu0 0.0
    %169 = vmatpush.msra.mxu0 0.0
    %170 = vmatpush.msra.mxu0 0.0
    %v171 = vand.u32 %v19, 4294901760
    %v172 = vsub.f32 %v19, %v171
    %v173 = vand.u32 %v172, 4294901760
    %174 = vmatpush.msra.mxu0 %v173
    %v175 = vand.u32 %v54, 4294901760
    %176 = vmatmul.f32.gmra.mxu0 %v175
    %v177 = vpop.f32.mrf.mxu0
    %v178 = vadd.f32 %v154, %v177
    %179 = vdwg.mxu0
    %180 = vmatpush.msra.mxu0 0.0
    %181 = vmatpush.msra.mxu0 0.0
    %182 = vmatpush.msra.mxu0 0.0
    %183 = vmatpush.msra.mxu0 0.0
    %184 = vmatpush.msra.mxu0 0.0
    %185 = vmatpush.msra.mxu0 0.0
    %186 = vmatpush.msra.mxu0 0.0
    %187 = vmatpush.msra.mxu0 0.0
    %188 = vmatpush.msra.mxu0 0.0
    %189 = vmatpush.msra.mxu0 0.0
    %190 = vmatpush.msra.mxu0 0.0
    %191 = vmatpush.msra.mxu0 0.0
    %192 = vmatpush.msra.mxu0 0.0
    %193 = vmatpush.msra.mxu0 0.0
    %194 = vmatpush.msra.mxu0 0.0
    %v195 = vand.u32 %v19, 4294901760
    %196 = vmatpush.msra.mxu0 %v195
    %v197 = vand.u32 %v54, 4294901760
    %198 = vmatmul.f32.gmra.mxu0 %v197
    %v199 = vpop.f32.mrf.mxu0
    %v200 = vadd.f32 %v178, %v199
    %201 = vdwg.mxu0
    %v202 = vld [vmem:[%s2] sm:$0x1]
    %v204 = vperm.slane %v202, 0
    %v206 = vmul.f32 %v200, %v204
    %v207 = vld [vmem:[%s3] sm:$0x1]
    %v209 = vperm.slane %v207, 0
    %v211 = vadd.f32 %v206, %v209
    %v212 = vand.u32 2147483647, %v211
    %vm213 = vcmp.le.f32.partialorder %v212, 0.7853982
    %vm214 = vcmp.lt.s32.totalorder %v211, 0
    %v215 = vand.u32 %v211, 2139095040
    %v216 = vshrl.u32 %v215, 23
    %v217 = vsub.s32 %v216, 127
    %v218 = vand.u32 2147483647, %v211
    %v219 = vand.u32 %v218, 8388607
    %v220 = vor.u32 %v219, 8388608
    %v221 = vsub.s32 0, %v220
    %v222 = vadd.s32 %v217, 1
    %vm223 = vcmp.gt.s32.totalorder %v222, 0
    %v224 = vsel %vm223, %v222, 0
    %v225 = vshrl.u32 %v224, 5
    %v226 = vand.u32 %v224, 31
    %v227 = vsub.s32 32, %v226
    %v228 = vshrl.u32 683565275, %v227
    %v229 = vshll.u32 683565275, %v226
    %v230 = vshrl.u32 2475754826, %v227
    %v231 = vor.u32 %v229, %v230
    %v232 = vshll.u32 2475754826, %v226
    %v233 = vshrl.u32 2131351028, %v227
    %v234 = vor.u32 %v232, %v233
    %v235 = vshll.u32 2131351028, %v226
    %v236 = vshrl.u32 2102212464, %v227
    %v237 = vor.u32 %v235, %v236
    %v238 = vshll.u32 2102212464, %v226
    %v239 = vshrl.u32 920167782, %v227
    %v240 = vor.u32 %v238, %v239
    %v241 = vshll.u32 920167782, %v226
    %v242 = vshrl.u32 1326507024, %v227
    %v243 = vor.u32 %v241, %v242
    %vm244 = vcmp.lt.s32.totalorder %v225, 1
    %vm245 = vcmp.lt.s32.totalorder %v225, 2
    %vm246 = vcmp.lt.s32.totalorder %v225, 3
    %vm247 = vcmp.lt.s32.totalorder %v225, 4
    %v248 = vsel %vm244, %v228, %v231
    %v249 = vsel %vm247, %v237, 2102212464
    %v250 = vsel %vm246, %v234, %v249
    %v251 = vsel %vm245, %v248, %v250
    %v252 = vsel %vm244, %v231, %v234
    %v253 = vsel %vm247, %v240, 920167782
    %v254 = vsel %vm246, %v237, %v253
    %v255 = vsel %vm245, %v252, %v254
    %v256 = vsel %vm244, %v234, %v237
    %v257 = vsel %vm247, %v243, 1326507024
    %v258 = vsel %vm246, %v240, %v257
    %v259 = vsel %vm245, %v256, %v258
    %v260 = vshll.u32 %v220, 8
    %v261 = vand.u32 %v260, 65535
    %v262 = vshrl.u32 %v260, 16
    %v263 = vand.u32 %v259, 65535
    %v264 = vshrl.u32 %v259, 16
    %v265 = vmul.u32 %v261, %v263
    %v266 = vmul.u32 %v261, %v264
    %v267 = vmul.u32 %v262, %v263
    %v268 = vmul.u32 %v262, %v264
    %v269 = vshll.u32 %v266, 16
    %v270 = vshrl.u32 %v266, 16
    %v271 = vshll.u32 %v267, 16
    %v272 = vshrl.u32 %v267, 16
    %vm273 = vc.u32 %v265, %v269
    %v274 = vsel %vm273, 1, 0
    %v275 = vadd.s32 %v265, %v269
    %v276 = vadd.s32 %v268, %v274
    %vm277 = vc.u32 %v275, %v271
    %v278 = vsel %vm277, 1, 0
    %v279 = vadd.s32 %v275, %v271
    %v280 = vadd.s32 %v276, %v278
    %v281 = vadd.s32 %v280, %v270
    %v282 = vadd.s32 %v281, %v272
    %v283 = vand.u32 %v260, 65535
    %v284 = vshrl.u32 %v260, 16
    %v285 = vand.u32 %v255, 65535
    %v286 = vshrl.u32 %v255, 16
    %v287 = vmul.u32 %v283, %v285
    %v288 = vmul.u32 %v283, %v286
    %v289 = vmul.u32 %v284, %v285
    %v290 = vmul.u32 %v284, %v286
    %v291 = vshll.u32 %v288, 16
    %v292 = vshrl.u32 %v288, 16
    %v293 = vshll.u32 %v289, 16
    %v294 = vshrl.u32 %v289, 16
    %vm295 = vc.u32 %v287, %v291
    %v296 = vsel %vm295, 1, 0
    %v297 = vadd.s32 %v287, %v291
    %v298 = vadd.s32 %v290, %v296
    %vm299 = vc.u32 %v297, %v293
    %v300 = vsel %vm299, 1, 0
    %v301 = vadd.s32 %v297, %v293
    %v302 = vadd.s32 %v298, %v300
    %v303 = vadd.s32 %v302, %v292
    %v304 = vadd.s32 %v303, %v294
    %v305 = vmul.u32 %v260, %v251
    %v306 = vadd.s32 %v282, %v301
    %vm307 = vc.u32 %v282, %v301
    %v308 = vadd.s32 %v304, 1
    %v309 = vsel %vm307, %v308, %v304
    %v310 = vadd.s32 %v305, %v309
    %v311 = vadd.s32 %v310, 536870912
    %v312 = vshrl.u32 %v311, 30
    %v313 = vshll.u32 %v312, 30
    %v314 = vsub.s32 %v310, %v313
    %vm315 = vcmp.lt.s32.totalorder %v314, 0
    %v316 = vsub.s32 0, %v314
    %v317 = vsel %vm315, %v316, %v314
    %v318 = vclz %v317
    %v319 = vsub.s32 %v318, 2
    %vm320 = vcmp.gt.s32.totalorder 0, %v319
    %v321 = vsel %vm320, 0, %v319
    %v322 = vsub.s32 32, %v321
    %v323 = vshll.u32 %v314, %v321
    %v324 = vshrl.u32 %v306, %v322
    %v325 = vor.u32 %v323, %v324
    %v326 = vsub.s32 4294967266, %v321
    %v327 = vadd.s32 %v326, 127
    %v328 = vshll.u32 %v327, 23
    %v329 = vor.u32 4788187, %v328
    %v330 = vand.u32 2147483647, %v329
    %v332 = vcvt.s32.f32 %v325
    %v333 = vmul.f32 %v332, %v330
    %v334 = vxor.u32 %v333, 2147483648
    %v335 = vsel %vm214, %v334, %v333
    %v336 = vsub.s32 4, %v312
    %v337 = vsel %vm214, %v336, %v312
    %v338 = vsel %vm213, %v211, %v335
    %v339 = vsel %vm213, 0, %v337
    %v340 = vmul.f32 %v338, %v338
    %v341 = vmul.f32 %v340, -0.001358992
    %v342 = vadd.f32 %v341, 0.041655596
    %v343 = vmul.f32 %v340, %v342
    %v344 = vadd.f32 %v343, -0.4999988
    %v345 = vmul.f32 %v340, %v344
    %v346 = vadd.f32 1.0, %v345
    %v347 = vmul.f32 %v338, %v338
    %v348 = vmul.f32 %v347, -0.00019511016
    %v349 = vadd.f32 %v348, 0.008332121
    %v350 = vmul.f32 %v347, %v349
    %v351 = vadd.f32 %v350, -0.16666654
    %v352 = vmul.f32 %v347, %v351
    %v353 = vadd.f32 %v352, 1.0
    %v354 = vmul.f32 %v353, %v338
    %vm355 = vweird.f32 %v211
    %v356 = vadd.s32 %v339, 3
    %v357 = vand.u32 %v356, 3
    %vm358 = vcmp.lt.s32.totalorder %v357, 2
    %vm359 = vcmp.eq.s32.totalorder %v357, 0
    %v360 = vxor.u32 %v354, 2147483648
    %v361 = vsel %vm359, %v346, %v360
    %vm362 = vcmp.eq.s32.totalorder %v357, 2
    %v363 = vxor.u32 %v346, 2147483648
    %v364 = vsel %vm362, %v363, %v354
    %v365 = vsel %vm358, %v361, %v364
    %v366 = vsel %vm355, nan, %v365
    %367 = vst [vmem:[#allocation2] sm:$0x3] %v366
    // Predicated region
    $region18: #{tpu_custom_call.1} parent=1 // pred_check
      _
    $region19: #{tpu_custom_call.1} parent=1 // pred_check_branch
      %369 = sbr.rel (0) target = $region21
    $region20: #{tpu_custom_call.1} parent=1 // pred_region
      %371 = vsyncadd [#allocation3], 0
      %s373 = sshll.u32 [#allocation2], 4
      %s374 = int_to_ptr.vmem [resolvable:$true] %s373
      %s375 = sshll.u32 %s4, 4
      %s376 = int_to_ptr.hbm [resolvable:$true] %s375
      %378 = dma.vmem_to_hbm [thread:$0]  %s374, 32, %s376, [#allocation3]
    $region21: #{tpu_custom_call.1} parent=1 // pred_fallthru
      _
    // Predicated region
    $region22: #{tpu_custom_call.1} parent=1 // pred_check
      _
    $region23: #{tpu_custom_call.1} parent=1 // pred_check_branch
      %380 = sbr.rel (0) target = $region25
    $region24: #{tpu_custom_call.1} parent=1 // pred_region
      %382 = dma.done [#allocation3], 32
    $region25: #{tpu_custom_call.1} parent=1 // pred_fallthru
      _
    %383 = vsyncpa [#allocation3], 1

</llo_original>
